<compile_context>
chip_gen: v7x
topology: tpu7x:2x2x1
jax: 0.10.0
libtpu: 0.0.40
codegen_flags: <defaults>
</compile_context>

<pallas_src>
import functools

import jax
import jax.numpy as jnp
from jax.experimental import pallas as pl
from jax.experimental.pallas import tpu as pltpu

LANE = 128
_B_RESIDENT_BYTES = 8 * 1024 * 1024   # keep the (K, F) HW operand fully VMEM-resident below this
_VMEM_FLOOR = 16 * 1024 * 1024
_VMEM_CAP = 48 * 1024 * 1024          # bounded so it is safe even on v7x (64 MiB / TC)


# ------------------------------- small helpers -------------------------------

def _round_up(x, m):
    return (x + m - 1) // m * m


def _pick_tile(dim, candidates, prefer_at_least_two=False):
    """Largest candidate dividing dim; optionally prefer one that yields >= 2 tiles."""
    divs = [c for c in candidates if c <= dim and dim % c == 0]
    if not divs:
        # Unreachable in practice (all dims are padded to multiples of 128 == min candidate);
        # bounded fallback so a non-dividing dim can never blow the VMEM budget.
        return min(dim, candidates[-1])
    if prefer_at_least_two:
        multi = [c for c in divs if dim // c >= 2]
        if multi:
            return multi[0]
    return divs[0]


def _vmem_limit(footprint_bytes):
    """Scoped-VMEM request derived from the actual tile footprint, with headroom."""
    return int(min(max(int(footprint_bytes * 1.5) + (4 << 20), _VMEM_FLOOR), _VMEM_CAP))


def _pad_to(x, shape):
    pads = [(0, t - s) for s, t in zip(x.shape, shape)]
    return jnp.pad(x, pads)


# ----------------------------- Pallas kernels --------------------------------

def _matmul_act_kernel(a_ref, b_ref, o_ref, acc_ref, *, activation, valid_cols,
                       b_resident, tk):
    """Tiled (M, K) @ (K, F): f32 VMEM-scratch accumulation, fused activation epilogue.

    grid = (M // tm  [parallel],  K // tk  [arbitrary, reduction innermost]).
    If b_resident, b_ref holds the full (K, F) operand (fetched once per layer) and the
    current (tk, F) strip is sliced in VMEM.
    """
    k = pl.program_id(1)

    if b_resident:
        off = pl.multiple_of(k * tk, 128)
        b = b_ref[pl.ds(off, tk), :]
    else:
        b = b_ref[...]

    part = jnp.dot(a_ref[...], b, preferred_element_type=jnp.float32)

    @pl.when(k == 0)
    def _():
        acc_ref[...] = part          # direct store: no zero-init + reload

    @pl.when(k != 0)
    def _():
        acc_ref[...] += part

    @pl.when(k == pl.num_programs(1) - 1)
    def _():
        acc = acc_ref[...]
        if activation == "relu":
            out = jnp.maximum(acc, 0.0)
        elif activation == "softmax":
            # Softmax over the feature axis, masking padded lane columns.
            col = jax.lax.broadcasted_iota(jnp.int32, acc.shape, 1)
            logits = jnp.where(col < valid_cols, acc, jnp.float32(-1e30))
            m = jnp.max(logits, axis=1, keepdims=True)
            e = jnp.exp(logits - m)
            out = e * pl.reciprocal(jnp.sum(e, axis=1, keepdims=True), approx=True)
        else:
            out = acc
        o_ref[...] = out.astype(o_ref.dtype)


def _rel_proj_kernel(h_ref, w_ref, o_ref):
    """Per-relation projection HW[r] = H @ W_r (relation dim squeezed via None blocks)."""
    o_ref[...] = jnp.dot(h_ref[...], w_ref[...],
                         preferred_element_type=jnp.float32).astype(o_ref.dtype)


# ----------------------------- pallas_call wrappers ---------------------------

def _matmul_fused(a, b, activation, valid_cols, out_dtype=jnp.float32):
    """a: (M, K) bf16, b: (K, F) bf16 -> (M, F) out_dtype, with fused activation."""
    M, K = a.shape
    K2, F = b.shape
    assert K == K2
    tm = _pick_tile(M, (512, 256, 128), prefer_at_least_two=True)
    tk = _pick_tile(K, (2048, 1024, 512, 256, 128))
    b_resident = (K * F * 2) <= _B_RESIDENT_BYTES

    out_bytes = jnp.dtype(out_dtype).itemsize
    footprint = (2 * tm * tk * 2                                   # A, double-buffered bf16
                 + (2 * K * F * 2 if b_resident else 2 * tk * F * 2)  # B
                 + 2 * tm * F * out_bytes                          # resident output block
                 + tm * F * 4)                                     # f32 accumulator scratch

    kernel = functools.partial(_matmul_act_kernel, activation=activation,
                               valid_cols=valid_cols, b_resident=b_resident, tk=tk)
    if b_resident:
        b_spec = pl.BlockSpec((K, F), lambda i, k: (0, 0))         # fetched once per layer
    else:
        b_spec = pl.BlockSpec((tk, F), lambda i, k: (k, 0))

    return pl.pallas_call(
        kernel,
        out_shape=jax.ShapeDtypeStruct((M, F), out_dtype),
        grid_spec=pltpu.PrefetchScalarGridSpec(
            num_scalar_prefetch=0,
            grid=(M // tm, K // tk),
            in_specs=[
                pl.BlockSpec((tm, tk), lambda i, k: (i, k)),
                b_spec,
            ],
            out_specs=pl.BlockSpec((tm, F), lambda i, k: (i, 0)),
            scratch_shapes=[pltpu.VMEM((tm, F), jnp.float32)],
        ),
        compiler_params=pltpu.CompilerParams(
            dimension_semantics=("parallel", "arbitrary"),
            vmem_limit_bytes=_vmem_limit(footprint),
        ),
    )(a, b)


def _relation_project(h, w):
    """h: (N_pad, in_pad) bf16, w: (R, in_pad, out_pad) bf16 -> (R, N_pad, out_pad) bf16."""
    N_pad, in_pad = h.shape
    R, in_pad2, out_pad = w.shape
    assert in_pad == in_pad2
    tn = _pick_tile(N_pad, (512, 256, 128), prefer_at_least_two=True)
    footprint = 2 * tn * in_pad * 2 + 2 * in_pad * out_pad * 2 + 2 * tn * out_pad * 2
    return pl.pallas_call(
        _rel_proj_kernel,
        out_shape=jax.ShapeDtypeStruct((R, N_pad, out_pad), jnp.bfloat16),
        grid_spec=pltpu.PrefetchScalarGridSpec(
            num_scalar_prefetch=0,
            # Node-tile outer, relation inner: the large H tile stays VMEM-resident across
            # relations; only the small per-relation W_r blocks stream from HBM.
            grid=(N_pad // tn, R),
            in_specs=[
                pl.BlockSpec((tn, in_pad), lambda i, r: (i, 0)),
                pl.BlockSpec((None, in_pad, out_pad), lambda i, r: (r, 0, 0)),
            ],
            out_specs=pl.BlockSpec((None, tn, out_pad), lambda i, r: (r, i, 0)),
        ),
        compiler_params=pltpu.CompilerParams(
            dimension_semantics=("parallel", "arbitrary"),
            vmem_limit_bytes=_vmem_limit(footprint),
        ),
    )(h, w)


def flatten_adjacency(adj, n_pad=None):
    """(R, N, N) dense adjacency A[r, dst, src] -> lane-dense bf16 (N_pad, R*N_pad).

    Columns are laid out as (r, src), matching the row layout of the flattened
    per-relation projections HW[r, src, :], so sum_r A_r @ HW_r == A_flat @ HW_flat.
    """
    R, N, _ = adj.shape
    n_pad = n_pad or _round_up(N, LANE)
    a = _pad_to(adj, (R, n_pad, n_pad))
    a = jnp.transpose(a, (1, 0, 2)).reshape(n_pad, R * n_pad)
    return a.astype(jnp.bfloat16)


# ------------------------------ Model (glue in plain JAX) ---------------------

def _xavier_uniform(key, shape, gain):
    fan_in, fan_out = shape[-2], shape[-1]
    bound = gain * jnp.sqrt(6.0 / (fan_in + fan_out))
    return jax.random.uniform(key, shape, jnp.float32, -bound, bound)


class RGCNModelPallas:
    def __init__(self, num_nodes, h_dim, out_dim, num_rels,
                 num_bases=-1, num_hidden_layers=1, key=None):
        if key is None:
            key = jax.random.PRNGKey(0)
        if num_bases <= 0 or num_bases > num_rels:
            num_bases = num_rels
        self.num_nodes, self.h_dim, self.out_dim = num_nodes, h_dim, out_dim
        self.num_rels, self.num_bases = num_rels, num_bases
        self.num_hidden_layers = num_hidden_layers

        gain = jnp.sqrt(2.0)  # nn.init.calculate_gain('relu')
        keys = jax.random.split(key, 2 * (2 + num_hidden_layers))
        ki = iter(range(len(keys)))

        def make_layer(in_feat, out_feat):
            w = _xavier_uniform(keys[next(ki)], (num_bases, in_feat, out_feat), gain)
            w_comp = None
            if num_bases < num_rels:
                w_comp = _xavier_uniform(keys[next(ki)], (num_rels, num_bases), gain)
            else:
                next(ki)
            return w, w_comp

        self.layers = [make_layer(num_nodes, h_dim)]
        for _ in range(num_hidden_layers):
            self.layers.append(make_layer(h_dim, h_dim))
        self.layers.append(make_layer(h_dim, out_dim))

    @staticmethod
    def _effective_weight(w, w_comp, num_rels):
        if w_comp is None:
            return w
        # Faithful to the PyTorch code: a *reshape* (view), not a transpose.
        num_bases, in_feat, out_feat = w.shape
        wv = w.reshape(in_feat, num_bases, out_feat)
        return jnp.matmul(w_comp, wv).reshape(num_rels, in_feat, out_feat)

    def _padded_weights(self, n_pad):
        """Effective per-relation weights, zero-padded lane-dense, bf16."""
        R = self.num_rels
        h_pad = _round_up(self.h_dim, LANE)
        o_pad = _round_up(self.out_dim, LANE)
        pads = ([(n_pad, h_pad)]
                + [(h_pad, h_pad)] * self.num_hidden_layers
                + [(h_pad, o_pad)])
        ws = []
        for (w, w_comp), (pi, po) in zip(self.layers, pads):
            eff = self._effective_weight(w, w_comp, R)
            ws.append(_pad_to(eff, (R, pi, po)).astype(jnp.bfloat16))
        return ws

    def forward(self, adj_flat_bf16):
        """adj_flat_bf16: (N_pad, R*N_pad) bf16 flattened normalized adjacency."""
        N_pad = adj_flat_bf16.shape[0]
        R = self.num_rels
        assert adj_flat_bf16.shape[1] == R * N_pad
        ws = self._padded_weights(N_pad)

        # Input layer: node 'id' features are one-hot, so H @ W0_r == W0_r and the
        # relation-summed aggregation is one (N_pad, R*N_pad) @ (R*N_pad, h_pad) matmul.
        # The bf16 cast of the intermediate is fused into the relu epilogue.
        h = _matmul_fused(adj_flat_bf16, ws[0].reshape(R * N_pad, -1),
                          activation="relu", valid_cols=self.h_dim,
                          out_dtype=jnp.bfloat16)

        # Hidden layers: precompute HW[r] = H @ W_r once (hoisted out of the dst-tiled
        # aggregation), then one long-K matmul with a fused relu->bf16 epilogue.
        for w in ws[1:-1]:
            hw = _relation_project(h, w)
            h = _matmul_fused(adj_flat_bf16, hw.reshape(R * N_pad, -1),
                              activation="relu", valid_cols=self.h_dim,
                              out_dtype=jnp.bfloat16)

        # Output layer: masked softmax over the valid feature columns, f32 output.
        hw = _relation_project(h, ws[-1])
        out = _matmul_fused(adj_flat_bf16, hw.reshape(R * N_pad, -1),
                            activation="softmax", valid_cols=self.out_dim,
                            out_dtype=jnp.float32)
        return out[: self.num_nodes, : self.out_dim]


# ------------------------------ reference (pure JAX) --------------------------

def _reference_forward(model, adj_flat_bf16):
    """Pure-JAX mirror of the kernel pipeline (same bf16 cast points, f32 accumulation)."""
    f32 = lambda x: x.astype(jnp.float32)
    A = f32(adj_flat_bf16)
    N_pad = adj_flat_bf16.shape[0]
    R = model.num_rels
    ws = model._padded_weights(N_pad)

    h = jnp.maximum(A @ f32(ws[0]).reshape(R * N_pad, -1), 0.0).astype(jnp.bfloat16)
    for w in ws[1:-1]:
        hw = jnp.einsum("nk,rkf->rnf", f32(h), f32(w)).astype(jnp.bfloat16)
        h = jnp.maximum(A @ f32(hw).reshape(R * N_pad, -1), 0.0).astype(jnp.bfloat16)
    hw = jnp.einsum("nk,rkf->rnf", f32(h), f32(ws[-1])).astype(jnp.bfloat16)
    logits = (A @ f32(hw).reshape(R * N_pad, -1))[: model.num_nodes, : model.out_dim]
    return jax.nn.softmax(logits, axis=1)


# ------------------------------------ main ------------------------------------

if __name__ == "__main__":
    # Small synthetic heterogeneous graph (stands in for the DGL graph / datasets).
    NUM_NODES = 32
    H_DIM = 16
    OUT_DIM = 8
    NUM_RELS = 3
    NUM_EDGES = 200

    key = jax.random.PRNGKey(0)
    k_src, k_dst, k_rel, k_norm, k_model = jax.random.split(key, 5)

    src = jax.random.randint(k_src, (NUM_EDGES,), 0, NUM_NODES)
    dst = jax.random.randint(k_dst, (NUM_EDGES,), 0, NUM_NODES)
    rel = jax.random.randint(k_rel, (NUM_EDGES,), 0, NUM_RELS)
    norm = jax.random.uniform(k_norm, (NUM_EDGES,), jnp.float32, 0.1, 1.0)

    # Dense per-relation normalized adjacency: A[r, dst, src] += norm.
    adj = jnp.zeros((NUM_RELS, NUM_NODES, NUM_NODES), jnp.float32)
    adj = adj.at[rel, dst, src].add(norm)

    model = RGCNModelPallas(NUM_NODES, H_DIM, OUT_DIM, NUM_RELS,
                            num_bases=-1, num_hidden_layers=1, key=k_model)

    # TODO(synk): DGL's sparse message-passing is represented here as a dense
    # per-relation adjacency folded into one lane-dense (N_pad, R*N_pad) bf16 operand.
    adj_flat_bf = flatten_adjacency(adj)

    out = model.forward(adj_flat_bf)
    out = jax.block_until_ready(out)

    ref = _reference_forward(model, adj_flat_bf)
    assert out.shape == (NUM_NODES, OUT_DIM)
    max_err = float(jnp.max(jnp.abs(out - ref)))
    assert max_err < 1e-2, f"mismatch vs reference: max abs err {max_err}"

    print("KERNEL_OK")
</pallas_src>

<mosaic_0001>
module attributes {stable_mosaic.version = 11 : i64} {
  func.func @_matmul_act_kernel(%arg0: i32, %arg1: i32, %arg2: memref<128x128xbf16, #tpu.memory_space<vmem>>, %arg3: memref<384x128xbf16, #tpu.memory_space<vmem>>, %arg4: memref<128x128xbf16, #tpu.memory_space<vmem>>, %arg5: memref<128x128xf32, #tpu.memory_space<vmem>>) attributes {dimension_semantics = [#tpu.dimension_semantics<parallel>, #tpu.dimension_semantics<arbitrary>], iteration_bounds = array<i64: 1, 3>, scalar_prefetch = 0 : i64, scratch_operands = 1 : i64, tpu.core_type = #tpu.core_type<tc>, window_params = [{transform_indices = @transform_0, window_bounds = array<i64: 128, 128>}, {pipeline_mode = #tpu.pipeline_mode<synchronous>, transform_indices = @transform_1, window_bounds = array<i64: 384, 128>}, {transform_indices = @transform_2, window_bounds = array<i64: 128, 128>}]} {
    %c128_i32 = arith.constant 128 : i32
    %0 = arith.muli %arg1, %c128_i32 : i32
    %1 = tpu.assume_multiple %0, 128 : i32
    %2 = arith.index_cast %1 : i32 to index
    %c0 = arith.constant 0 : index
    %3 = vector.load %arg3[%2, %c0] : memref<384x128xbf16, #tpu.memory_space<vmem>>, vector<128x128xbf16>
    %c0_0 = arith.constant 0 : index
    %c0_1 = arith.constant 0 : index
    %4 = vector.load %arg2[%c0_0, %c0_1] : memref<128x128xbf16, #tpu.memory_space<vmem>>, vector<128x128xbf16>
    %cst = arith.constant dense<0.000000e+00> : vector<128x128xf32>
    %5 = tpu.matmul %4, %3, %cst {dimension_numbers = #tpu.dot_dimension_numbers<[1], [0], [0], [1], [0, 0, 1, 1], [], []>} : vector<128x128xbf16>, vector<128x128xbf16>, vector<128x128xf32> -> vector<128x128xf32>
    %c0_i32 = arith.constant 0 : i32
    %6 = arith.cmpi eq, %arg1, %c0_i32 : i32
    %7 = arith.extui %6 : i1 to i32
    %c0_i32_2 = arith.constant 0 : i32
    %8 = arith.cmpi ne, %7, %c0_i32_2 : i32
    scf.if %8 {
      %c0_6 = arith.constant 0 : index
      %c0_7 = arith.constant 0 : index
      %15 = vector.load %arg5[%c0_6, %c0_7] : memref<128x128xf32, #tpu.memory_space<vmem>>, vector<128x128xf32>
      tpu.vector_store %arg5[%c0_6, %c0_7], %5 {strides = array<i32>} : memref<128x128xf32, #tpu.memory_space<vmem>>, vector<128x128xf32>,
    } else {
    }
    %c0_i32_3 = arith.constant 0 : i32
    %9 = arith.cmpi ne, %arg1, %c0_i32_3 : i32
    %10 = arith.extui %9 : i1 to i32
    %c0_i32_4 = arith.constant 0 : i32
    %11 = arith.cmpi ne, %10, %c0_i32_4 : i32
    scf.if %11 {
      %c0_6 = arith.constant 0 : index
      %c0_7 = arith.constant 0 : index
      %15 = vector.load %arg5[%c0_6, %c0_7] : memref<128x128xf32, #tpu.memory_space<vmem>>, vector<128x128xf32>
      %16 = arith.addf %15, %5 : vector<128x128xf32>
      %c0_8 = arith.constant 0 : index
      %c0_9 = arith.constant 0 : index
      %17 = vector.load %arg5[%c0_8, %c0_9] : memref<128x128xf32, #tpu.memory_space<vmem>>, vector<128x128xf32>
      tpu.vector_store %arg5[%c0_8, %c0_9], %16 {strides = array<i32>} : memref<128x128xf32, #tpu.memory_space<vmem>>, vector<128x128xf32>,
    } else {
    }
    %c2_i32 = arith.constant 2 : i32
    %12 = arith.cmpi eq, %arg1, %c2_i32 : i32
    %13 = arith.extui %12 : i1 to i32
    %c0_i32_5 = arith.constant 0 : i32
    %14 = arith.cmpi ne, %13, %c0_i32_5 : i32
    scf.if %14 {
      %c0_6 = arith.constant 0 : index
      %c0_7 = arith.constant 0 : index
      %15 = vector.load %arg5[%c0_6, %c0_7] : memref<128x128xf32, #tpu.memory_space<vmem>>, vector<128x128xf32>
      %cst_8 = arith.constant 0.000000e+00 : f32
      %16 = vector.broadcast %cst_8 : f32 to vector<128x128xf32>
      %17 = arith.maximumf %15, %16 : vector<128x128xf32>
      %18 = arith.truncf %17 : vector<128x128xf32> to vector<128x128xbf16>
      %c0_9 = arith.constant 0 : index
      %c0_10 = arith.constant 0 : index
      %19 = vector.load %arg4[%c0_9, %c0_10] : memref<128x128xbf16, #tpu.memory_space<vmem>>, vector<128x128xbf16>
      tpu.vector_store %arg4[%c0_9, %c0_10], %18 {strides = array<i32>} : memref<128x128xbf16, #tpu.memory_space<vmem>>, vector<128x128xbf16>,
    } else {
    }
    return
  }
  func.func @transform_0(%arg0: i32, %arg1: i32) -> (i32, i32) {
    %c0_i32 = arith.constant 0 : i32
    return %arg0, %arg1 : i32, i32
  }
  func.func @transform_1(%arg0: i32, %arg1: i32) -> (i32, i32) {
    %c0_i32 = arith.constant 0 : i32
    %c0_i32_0 = arith.constant 0 : i32
    %c0_i32_1 = arith.constant 0 : i32
    return %c0_i32, %c0_i32_0 : i32, i32
  }
  func.func @transform_2(%arg0: i32, %arg1: i32) -> (i32, i32) {
    %c0_i32 = arith.constant 0 : i32
    %c0_i32_0 = arith.constant 0 : i32
    return %arg0, %c0_i32 : i32, i32
  }
}

</mosaic_0001>

<llo_original>
// kernel: tpu_custom_call.1
$region0: #{tpu_custom_call.1}
  #allocation0 [shape = 'u32[]', space=smem, size = 0x4, offset = 0x4, fixed_abs, tag = 'smem constant byte address 0x4 - core index']
  #allocation1 [shape = 'u32[144,128]{1,0:T(1,128)}', space=vmem, size = 0x12000, scoped, tag = 'internal scratch']
  #allocation2 [shape = 'f32[128,128]{1,0:T(8,128)}', space=vmem, size = 0x10000, scoped, tag = 'scratch operand']
  %s0 = inlined_call_operand.hbm [shape: bf16[128,384], index: 0, kind: input, shape index: {}]
  %s1 = inlined_call_operand.hbm [shape: bf16[384,128], index: 1, kind: input, shape index: {}]
  %s2 = inlined_call_operand.hbm [shape: bf16[128,128], index: 2, kind: output, shape index: {}]
  %s3 = sld [smem:[#allocation0]]
  $region61: #{tpu_custom_call.1} parent=0
    _
  %s5 = ssub.s32 1, %s3
  %s6 = scalar_select 0, %s5, %s3
  $region1: #{tpu_custom_call.1} parent=0
    #allocation3 [shape = 'u8[65536]{0}', space=vmem, size = 0x10000, scoped, tag = 'input window, operand 0']
    #allocation4 [shape = 's32[2]{0}', space=sflag, size = 0x8, scoped, tag = 'scoped memory for tpu_custom_call.1']
    #allocation5 [shape = 's32[2]{0}', space=sflag, size = 0x8, scoped, tag = 'scoped memory for tpu_custom_call.1']
    #allocation6 [shape = 'u8[98304]{0}', space=vmem, size = 0x18000, scoped, tag = 'input window, operand 1, single buffered']
    #allocation7 [shape = 's32[1]{0}', space=sflag, size = 0x4, scoped, tag = 'scoped memory for tpu_custom_call.1']
    #allocation8 [shape = 'u8[32768]{0}', space=vmem, size = 0x8000, scoped, tag = 'output window, operand 0, single buffered']
    %7 = vsyncpa [#allocation4], 0
    %s8 = scalar_lea.sflag [#allocation4], 1
    %9 = vsyncpa %s8, 0
    %10 = vsyncpa [#allocation7], 0
    %11 = vsyncpa [#allocation5], 0
    loop: start=0, step=1, limit=5
    $region2: #{tpu_custom_call.1} parent=1 // loop_pre_header
      _
    $region3: #{tpu_custom_call.1} parent=1 // loop_header
      %s13 = sphi 0, %s17
      %p14 = scmp.ge.s32.totalorder %s13, 5
      %s20 = sphi 0, %s32
      %s21 = sphi 0, %s28
      %s22 = sphi 0, %s20
      %s23 = sphi 0, %s21
      %s24 = sphi 0, %s22
      %s25 = sphi 0, %s23
      %s37 = sphi 0, %s39
      %s40 = sphi 0, %s37
      %s41 = sphi 0, %s40
      %s57 = sphi 0, %s41
      %s61 = sphi 0, %s61
      %s63 = sphi 0, %s61
      %s64 = sphi 0, %s63
      %s78 = sphi 0, %s64
      %s84 = sphi 0, %s86
      %s87 = sphi 0, %s84
      %s88 = sphi 0, %s87
      %s104 = sphi 0, %s88
    $region4: #{tpu_custom_call.1} parent=1 // loop_header_branch
      %16 = sbr.rel (%p14) target = $region8
    $region5: #{tpu_custom_call.1} parent=1 // loop_body
      %s18 = ssub.s32 %s13, 1
      %s19 = ssub.s32 %s13, 2
      %s26 = sadd.s32 1, %s21
      %p27 = scmp.ge.s32.totalorder %s26, 3
      %s28 = scalar_select %p27, 0, %s26
      %s29 = sadd.s32 1, %s20
      %s30 = scalar_select %p27, %s29, %s20
      %p31 = scmp.ge.s32.totalorder %s30, 1
      %s32 = scalar_select %p31, 0, %s30
      %s33 = ssub.s32 %s20, %s32
      %s34 = ssub.s32 %s21, %s28
      %s35 = sor.u32 %s33, %s34
      %p36 = scmp.eq.s32.totalorder %s35, 0
      %s38 = sadd.s32 %s37, 1
      %s39 = scalar_select %p36, %s37, %s38
      %p42 = pneg %p36
      %p43 = scmp.eq.s32.totalorder %s13, 2
      %p44 = por %p42, %p43
      %p45 = scmp.ne.s32.totalorder %s37, %s40
      %p46 = scmp.eq.s32.totalorder %s13, 0
      %p47 = por %p45, %p46
      %p48 = scmp.ne.s32.totalorder %s37, %s40
      %p49 = scmp.eq.s32.totalorder %s18, 2
      %p50 = por %p48, %p49
      %p51 = scmp.ne.s32.totalorder %s40, %s41
      %p52 = scmp.eq.s32.totalorder %s18, 0
      %p53 = por %p51, %p52
      %p54 = scmp.ne.s32.totalorder %s40, %s41
      %p55 = scmp.eq.s32.totalorder %s19, 2
      %p56 = por %p54, %p55
      %p58 = scmp.ne.s32.totalorder %s41, %s57
      %p59 = scmp.eq.s32.totalorder %s19, 0
      %p60 = por %p58, %p59
      %s62 = sadd.s32 %s61, 1
      %p65 = scmp.eq.s32.totalorder %s13, 2
      %p66 = scmp.ne.s32.totalorder %s61, %s63
      %p67 = scmp.eq.s32.totalorder %s13, 0
      %p68 = por %p66, %p67
      %p69 = scmp.ne.s32.totalorder %s61, %s63
      %p70 = scmp.eq.s32.totalorder %s18, 2
      %p71 = por %p69, %p70
      %p72 = scmp.ne.s32.totalorder %s63, %s64
      %p73 = scmp.eq.s32.totalorder %s18, 0
      %p74 = por %p72, %p73
      %p75 = scmp.ne.s32.totalorder %s63, %s64
      %p76 = scmp.eq.s32.totalorder %s19, 2
      %p77 = por %p75, %p76
      %p79 = scmp.ne.s32.totalorder %s64, %s78
      %p80 = scmp.eq.s32.totalorder %s19, 0
      %p81 = por %p79, %p80
      %s82 = ssub.s32 %s20, %s32
      %p83 = scmp.eq.s32.totalorder %s82, 0
      %s85 = sadd.s32 %s84, 1
      %s86 = scalar_select %p83, %s84, %s85
      %p89 = pneg %p83
      %p90 = scmp.eq.s32.totalorder %s13, 2
      %p91 = por %p89, %p90
      %p92 = scmp.ne.s32.totalorder %s84, %s87
      %p93 = scmp.eq.s32.totalorder %s13, 0
      %p94 = por %p92, %p93
      %p95 = scmp.ne.s32.totalorder %s84, %s87
      %p96 = scmp.eq.s32.totalorder %s18, 2
      %p97 = por %p95, %p96
      %p98 = scmp.ne.s32.totalorder %s87, %s88
      %p99 = scmp.eq.s32.totalorder %s18, 0
      %p100 = por %p98, %p99
      %p101 = scmp.ne.s32.totalorder %s87, %s88
      %p102 = scmp.eq.s32.totalorder %s19, 2
      %p103 = por %p101, %p102
      %p105 = scmp.ne.s32.totalorder %s88, %s104
      %p106 = scmp.eq.s32.totalorder %s19, 0
      %p107 = por %p105, %p106
      %p108 = scmp.le.s32.totalorder 1, %s13
      %p109 = scmp.lt.s32.totalorder %s13, 4
      %p110 = pnand %p108, %p109
      %p111 = pneg %p110
      // Predicated region
      $region9: #{tpu_custom_call.1} parent=5 // pred_check
        _
      $region10: #{tpu_custom_call.1} parent=5 // pred_check_branch
        %113 = sbr.rel (%p110) target = $region12
      $region11: #{tpu_custom_call.1} parent=5 // pred_region
        %s114 = ssub.s32 %s13, 1
        // Predicated region
        $region13: #{tpu_custom_call.1} parent=11 // pred_check
          %p115 = pneg %p74
        $region14: #{tpu_custom_call.1} parent=11 // pred_check_branch
          %117 = sbr.rel (%p115) target = $region16
        $region15: #{tpu_custom_call.1} parent=11 // pred_region
          %s119 = ssub.s32 3072, 3072
          %120 = vsyncadd [#allocation7], %s119
          %s121 = sshll.u32 [#allocation6], 4
          %s122 = int_to_ptr.vmem [resolvable:$true] %s121
          %127 = dma.hbm_to_vmem [thread:$0]  %s1, 3072, %s122, [#allocation7], 64, 64, 4
        $region16: #{tpu_custom_call.1} parent=11 // pred_fallthru
          _
      $region12: #{tpu_custom_call.1} parent=5 // pred_fallthru
        _
      %p128 = scmp.lt.s32.totalorder %s13, 3
      // Predicated region
      $region17: #{tpu_custom_call.1} parent=5 // pred_check
        %p129 = pneg %p128
      $region18: #{tpu_custom_call.1} parent=5 // pred_check_branch
        %131 = sbr.rel (%p129) target = $region20
      $region19: #{tpu_custom_call.1} parent=5 // pred_region
        // Predicated region
        $region21: #{tpu_custom_call.1} parent=19 // pred_check
          %p132 = pneg %p47
        $region22: #{tpu_custom_call.1} parent=19 // pred_check_branch
          %134 = sbr.rel (%p132) target = $region24
        $region23: #{tpu_custom_call.1} parent=19 // pred_region
          %s135 = sand.u32 %s37, 1
          %s136 = scalar_lea.sflag [#allocation4], %s135
          %s137 = sand.u32 %s37, 1
          %s138 = smul.addr %s137, 64
          %s139 = scalar_lea.vmem [#allocation3], %s138
          %s140 = smul.u32 16, %s20
          %s142 = ssub.s32 1024, 1024
          %143 = vsyncadd %s136, %s142
          %s144 = smul.addr %s140, 3
          %s145 = sadd.s32 %s21, %s144
          %s146 = smul.addr %s145, 64
          %s147 = scalar_lea.hbm %s0, %s146
          %s148 = sshll.u32 %s139, 4
          %s149 = int_to_ptr.vmem [resolvable:$true] %s148
          %154 = dma.hbm_to_vmem [thread:$0]  %s147, 1024, %s149, %s136, 192, 64, 4
        $region24: #{tpu_custom_call.1} parent=19 // pred_fallthru
          _
      $region20: #{tpu_custom_call.1} parent=5 // pred_fallthru
        _
      %p155 = scmp.le.s32.totalorder 1, %s13
      %p156 = scmp.lt.s32.totalorder %s13, 4
      %p157 = pnand %p155, %p156
      %p158 = pneg %p157
      // Predicated region
      $region25: #{tpu_custom_call.1} parent=5 // pred_check
        _
      $region26: #{tpu_custom_call.1} parent=5 // pred_check_branch
        %160 = sbr.rel (%p157) target = $region28
      $region27: #{tpu_custom_call.1} parent=5 // pred_region
        %s161 = ssub.s32 %s13, 1
        %s162 = sand.u32 %s40, 1
        %s163 = scalar_lea.sflag [#allocation4], %s162
        %s164 = sand.u32 %s40, 1
        %s165 = smul.addr %s164, 64
        %s166 = scalar_lea.vmem [#allocation3], %s165
        // Predicated region
        $region29: #{tpu_custom_call.1} parent=27 // pred_check
          %p167 = pneg %p53
        $region30: #{tpu_custom_call.1} parent=27 // pred_check_branch
          %169 = sbr.rel (%p167) target = $region32
        $region31: #{tpu_custom_call.1} parent=27 // pred_region
          %170 = dma.done %s163, 1024
        $region32: #{tpu_custom_call.1} parent=27 // pred_fallthru
          _
        // Predicated region
        $region33: #{tpu_custom_call.1} parent=27 // pred_check
          %p171 = pneg %p74
        $region34: #{tpu_custom_call.1} parent=27 // pred_check_branch
          %173 = sbr.rel (%p171) target = $region36
        $region35: #{tpu_custom_call.1} parent=27 // pred_region
          %174 = dma.done [#allocation7], 3072
        $region36: #{tpu_custom_call.1} parent=27 // pred_fallthru
          _
        %s175 = sand.u32 %s40, 1
        %s176 = scalar_lea.sflag [#allocation4], %s175
        %s177 = sand.u32 %s40, 1
        %s178 = smul.addr %s177, 64
        %s179 = scalar_lea.vmem [#allocation3], %s178
        %p180 = pneg %p53
        %p181 = pneg %p50
        %p182 = pneg %p74
        %p183 = pneg %p71
        %p184 = pneg %p100
        %p185 = pneg %p97
        %s186 = smul.u32 16, %s22
        %s187 = smul.u32 16, %s22
        %s189 = smul.u32 %s23, 128
        %s190 = sshra.s32 %s189, 3
        %s191 = sand.u32 %s189, 7
        %s192 = smul.addr %s190, 4
        %s193 = scalar_lea.vmem [#allocation6], %s192
        %v194 = vld [vmem:[%s193] sm:$0xf]
        %v195 = vld [vmem:[%s193 + $0x4] sm:$0xf]
        %v196 = vld [vmem:[%s193 + $0x8] sm:$0xf]
        %v197 = vld [vmem:[%s193 + $0xc] sm:$0xf]
        %v198 = vld [vmem:[%s193 + $0x10] sm:$0xf]
        %v199 = vld [vmem:[%s193 + $0x14] sm:$0xf]
        %v200 = vld [vmem:[%s193 + $0x18] sm:$0xf]
        %v201 = vld [vmem:[%s193 + $0x1c] sm:$0xf]
        %v202 = vld [vmem:[%s193 + $0x20] sm:$0xf]
        %v203 = vld [vmem:[%s193 + $0x24] sm:$0xf]
        %v204 = vld [vmem:[%s193 + $0x28] sm:$0xf]
        %v205 = vld [vmem:[%s193 + $0x2c] sm:$0xf]
        %v206 = vld [vmem:[%s193 + $0x30] sm:$0xf]
        %v207 = vld [vmem:[%s193 + $0x34] sm:$0xf]
        %v208 = vld [vmem:[%s193 + $0x38] sm:$0xf]
        %v209 = vld [vmem:[%s193 + $0x3c] sm:$0xf]
        %v210 = vld [vmem:[%s166] sm:$0xf]
        %v211 = vld [vmem:[%s166 + $0x4] sm:$0xf]
        %v212 = vld [vmem:[%s166 + $0x8] sm:$0xf]
        %v213 = vld [vmem:[%s166 + $0xc] sm:$0xf]
        %v214 = vld [vmem:[%s166 + $0x10] sm:$0xf]
        %v215 = vld [vmem:[%s166 + $0x14] sm:$0xf]
        %v216 = vld [vmem:[%s166 + $0x18] sm:$0xf]
        %v217 = vld [vmem:[%s166 + $0x1c] sm:$0xf]
        %v218 = vld [vmem:[%s166 + $0x20] sm:$0xf]
        %v219 = vld [vmem:[%s166 + $0x24] sm:$0xf]
        %v220 = vld [vmem:[%s166 + $0x28] sm:$0xf]
        %v221 = vld [vmem:[%s166 + $0x2c] sm:$0xf]
        %v222 = vld [vmem:[%s166 + $0x30] sm:$0xf]
        %v223 = vld [vmem:[%s166 + $0x34] sm:$0xf]
        %v224 = vld [vmem:[%s166 + $0x38] sm:$0xf]
        %v225 = vld [vmem:[%s166 + $0x3c] sm:$0xf]
        %v242 = vunpack.c.l.b16 %v210
        %v243 = vunpack.c.l.b16 %v211
        %v244 = vunpack.c.l.b16 %v212
        %v245 = vunpack.c.l.b16 %v213
        %v246 = vunpack.c.l.b16 %v214
        %v247 = vunpack.c.l.b16 %v215
        %v248 = vunpack.c.l.b16 %v216
        %v249 = vunpack.c.l.b16 %v217
        %v250 = vunpack.c.l.b16 %v218
        %v251 = vunpack.c.l.b16 %v219
        %v252 = vunpack.c.l.b16 %v220
        %v253 = vunpack.c.l.b16 %v221
        %v254 = vunpack.c.l.b16 %v222
        %v255 = vunpack.c.l.b16 %v223
        %v256 = vunpack.c.l.b16 %v224
        %v257 = vunpack.c.l.b16 %v225
        %v258 = vpack.c.b16 %v243, %v242
        %v259 = vpack.c.b16 %v245, %v244
        %v260 = vpack.c.b16 %v247, %v246
        %v261 = vpack.c.b16 %v249, %v248
        %v262 = vpack.c.b16 %v251, %v250
        %v263 = vpack.c.b16 %v253, %v252
        %v264 = vpack.c.b16 %v255, %v254
        %v265 = vpack.c.b16 %v257, %v256
        %v290 = vunpack.c.l.b16 %v194
        %v291 = vunpack.c.l.b16 %v195
        %v292 = vunpack.c.l.b16 %v196
        %v293 = vunpack.c.l.b16 %v197
        %v294 = vunpack.c.l.b16 %v198
        %v295 = vunpack.c.l.b16 %v199
        %v296 = vunpack.c.l.b16 %v200
        %v297 = vunpack.c.l.b16 %v201
        %v298 = vunpack.c.l.b16 %v202
        %v299 = vunpack.c.l.b16 %v203
        %v300 = vunpack.c.l.b16 %v204
        %v301 = vunpack.c.l.b16 %v205
        %v302 = vunpack.c.l.b16 %v206
        %v303 = vunpack.c.l.b16 %v207
        %v304 = vunpack.c.l.b16 %v208
        %v305 = vunpack.c.l.b16 %v209
        %v306 = vpack.c.b16 %v291, %v290
        %v307 = vpack.c.b16 %v293, %v292
        %v308 = vpack.c.b16 %v295, %v294
        %v309 = vpack.c.b16 %v297, %v296
        %v310 = vpack.c.b16 %v299, %v298
        %v311 = vpack.c.b16 %v301, %v300
        %v312 = vpack.c.b16 %v303, %v302
        %v313 = vpack.c.b16 %v305, %v304
        %322 = vmatprep.subr.bf16.mxu0 0
        %323 = vmatpush1.bf16.msra.mxu0 %v306
        %324 = vmatprep.subr.bf16.mxu0 0
        %325 = vmatpush1.bf16.msra.mxu0 %v307
        %326 = vmatprep.subr.bf16.mxu0 0
        %327 = vmatpush1.bf16.msra.mxu0 %v308
        %328 = vmatprep.subr.bf16.mxu0 0
        %329 = vmatpush1.bf16.msra.mxu0 %v309
        %330 = vmatprep.subr.bf16.mxu0 0
        %331 = vmatpush1.bf16.msra.mxu0 %v310
        %332 = vmatprep.subr.bf16.mxu0 0
        %333 = vmatpush1.bf16.msra.mxu0 %v311
        %334 = vmatprep.subr.bf16.mxu0 0
        %335 = vmatpush1.bf16.msra.mxu0 %v312
        %336 = vmatprep.subr.bf16.mxu0 0
        %337 = vmatpush1.bf16.msra.mxu0 %v313
        %338 = vmatprep.subr.bf16.mxu0 0
        %339 = vmatpush1.bf16.msra.mxu0 0
        %340 = vmatprep.subr.bf16.mxu0 0
        %341 = vmatpush1.bf16.msra.mxu0 0
        %342 = vmatprep.subr.bf16.mxu0 0
        %343 = vmatpush1.bf16.msra.mxu0 0
        %344 = vmatprep.subr.bf16.mxu0 0
        %345 = vmatpush1.bf16.msra.mxu0 0
        %346 = vmatprep.subr.bf16.mxu0 0
        %347 = vmatpush1.bf16.msra.mxu0 0
        %348 = vmatprep.subr.bf16.mxu0 0
        %349 = vmatpush1.bf16.msra.mxu0 0
        %350 = vmatprep.subr.bf16.mxu0 0
        %351 = vmatpush1.bf16.msra.mxu0 0
        %352 = vmatprep.subr.bf16.mxu0 0
        %353 = vmatpush1.bf16.msra.mxu0 0
        %354 = vmatprep.mubr.bf16.mxu0 0
        %355 = vmatmul.mubr.bf16.gmra.mrb[0].mxu0 %v258
        %v356 = vpop.f32.mrb[0].mxu0
        %v357 = vadd.f32 0.0, %v356
        %v358 = vpop.f32.mrb[0].mxu0
        %v359 = vpop.f32.mrb[0].mxu0
        %v360 = vadd.f32 0.0, %v359
        %v361 = vpop.f32.mrb[0].mxu0
        %362 = vmatprep.mubr.bf16.mxu0 0
        %363 = vmatmul.mubr.bf16.gmra.mrb[0].mxu0 %v259
        %v364 = vpop.f32.mrb[0].mxu0
        %v365 = vadd.f32 0.0, %v364
        %v366 = vpop.f32.mrb[0].mxu0
        %v367 = vpop.f32.mrb[0].mxu0
        %v368 = vadd.f32 0.0, %v367
        %v369 = vpop.f32.mrb[0].mxu0
        %370 = vmatprep.mubr.bf16.mxu0 0
        %371 = vmatmul.mubr.bf16.gmra.mrb[0].mxu0 %v260
        %v372 = vpop.f32.mrb[0].mxu0
        %v373 = vadd.f32 0.0, %v372
        %v374 = vpop.f32.mrb[0].mxu0
        %v375 = vpop.f32.mrb[0].mxu0
        %v376 = vadd.f32 0.0, %v375
        %v377 = vpop.f32.mrb[0].mxu0
        %378 = vmatprep.mubr.bf16.mxu0 0
        %379 = vmatmul.mubr.bf16.gmra.mrb[0].mxu0 %v261
        %v380 = vpop.f32.mrb[0].mxu0
        %v381 = vadd.f32 0.0, %v380
        %v382 = vpop.f32.mrb[0].mxu0
        %v383 = vpop.f32.mrb[0].mxu0
        %v384 = vadd.f32 0.0, %v383
        %v385 = vpop.f32.mrb[0].mxu0
        %386 = vmatprep.mubr.bf16.mxu0 0
        %387 = vmatmul.mubr.bf16.gmra.mrb[0].mxu0 %v262
        %v388 = vpop.f32.mrb[0].mxu0
        %v389 = vadd.f32 0.0, %v388
        %v390 = vpop.f32.mrb[0].mxu0
        %v391 = vpop.f32.mrb[0].mxu0
        %v392 = vadd.f32 0.0, %v391
        %v393 = vpop.f32.mrb[0].mxu0
        %394 = vmatprep.mubr.bf16.mxu0 0
        %395 = vmatmul.mubr.bf16.gmra.mrb[0].mxu0 %v263
        %v396 = vpop.f32.mrb[0].mxu0
        %v397 = vadd.f32 0.0, %v396
        %v398 = vpop.f32.mrb[0].mxu0
        %v399 = vpop.f32.mrb[0].mxu0
        %v400 = vadd.f32 0.0, %v399
        %v401 = vpop.f32.mrb[0].mxu0
        %402 = vmatprep.mubr.bf16.mxu0 0
        %403 = vmatmul.mubr.bf16.gmra.mrb[0].mxu0 %v264
        %v404 = vpop.f32.mrb[0].mxu0
        %v405 = vadd.f32 0.0, %v404
        %v406 = vpop.f32.mrb[0].mxu0
        %v407 = vpop.f32.mrb[0].mxu0
        %v408 = vadd.f32 0.0, %v407
        %v409 = vpop.f32.mrb[0].mxu0
        %410 = vmatprep.mubr.bf16.mxu0 0
        %411 = vmatmul.mubr.bf16.gmra.mrb[0].mxu0 %v265
        %v412 = vpop.f32.mrb[0].mxu0
        %v413 = vadd.f32 0.0, %v412
        %v414 = vpop.f32.mrb[0].mxu0
        %v415 = vpop.f32.mrb[0].mxu0
        %v416 = vadd.f32 0.0, %v415
        %v417 = vpop.f32.mrb[0].mxu0
        %418 = vdwg.mxu0
        %p419 = scmp.eq.s32.totalorder %s23, 0
        // Predicated region
        $region37: #{tpu_custom_call.1} parent=27 // pred_check
          %p420 = pneg %p419
        $region38: #{tpu_custom_call.1} parent=27 // pred_check_branch
          %422 = sbr.rel (%p420) target = $region40
        $region39: #{tpu_custom_call.1} parent=27 // pred_region
          %423 = vst [vmem:[#allocation2] sm:$0xff] %v357
          %424 = vst [vmem:[#allocation2 + $0x8] sm:$0xff] %v360
          %425 = vst [vmem:[#allocation2 + $0x10] sm:$0xff] %v365
          %426 = vst [vmem:[#allocation2 + $0x18] sm:$0xff] %v368
          %427 = vst [vmem:[#allocation2 + $0x20] sm:$0xff] %v373
          %428 = vst [vmem:[#allocation2 + $0x28] sm:$0xff] %v376
          %429 = vst [vmem:[#allocation2 + $0x30] sm:$0xff] %v381
          %430 = vst [vmem:[#allocation2 + $0x38] sm:$0xff] %v384
          %431 = vst [vmem:[#allocation2 + $0x40] sm:$0xff] %v389
          %432 = vst [vmem:[#allocation2 + $0x48] sm:$0xff] %v392
          %433 = vst [vmem:[#allocation2 + $0x50] sm:$0xff] %v397
          %434 = vst [vmem:[#allocation2 + $0x58] sm:$0xff] %v400
          %435 = vst [vmem:[#allocation2 + $0x60] sm:$0xff] %v405
          %436 = vst [vmem:[#allocation2 + $0x68] sm:$0xff] %v408
          %437 = vst [vmem:[#allocation2 + $0x70] sm:$0xff] %v413
          %438 = vst [vmem:[#allocation2 + $0x78] sm:$0xff] %v416
        $region40: #{tpu_custom_call.1} parent=27 // pred_fallthru
          _
        %p439 = scmp.ne.s32.totalorder %s23, 0
        // Predicated region
        $region41: #{tpu_custom_call.1} parent=27 // pred_check
          %p440 = pneg %p439
        $region42: #{tpu_custom_call.1} parent=27 // pred_check_branch
          %442 = sbr.rel (%p440) target = $region44
        $region43: #{tpu_custom_call.1} parent=27 // pred_region
          %v443 = vld [vmem:[#allocation2] sm:$0xff]
          %v444 = vld [vmem:[#allocation2 + $0x8] sm:$0xff]
          %v445 = vld [vmem:[#allocation2 + $0x10] sm:$0xff]
          %v446 = vld [vmem:[#allocation2 + $0x18] sm:$0xff]
          %v447 = vld [vmem:[#allocation2 + $0x20] sm:$0xff]
          %v448 = vld [vmem:[#allocation2 + $0x28] sm:$0xff]
          %v449 = vld [vmem:[#allocation2 + $0x30] sm:$0xff]
          %v450 = vld [vmem:[#allocation2 + $0x38] sm:$0xff]
          %v451 = vld [vmem:[#allocation2 + $0x40] sm:$0xff]
          %v452 = vld [vmem:[#allocation2 + $0x48] sm:$0xff]
          %v453 = vld [vmem:[#allocation2 + $0x50] sm:$0xff]
          %v454 = vld [vmem:[#allocation2 + $0x58] sm:$0xff]
          %v455 = vld [vmem:[#allocation2 + $0x60] sm:$0xff]
          %v456 = vld [vmem:[#allocation2 + $0x68] sm:$0xff]
          %v457 = vld [vmem:[#allocation2 + $0x70] sm:$0xff]
          %v458 = vld [vmem:[#allocation2 + $0x78] sm:$0xff]
          %v459 = vadd.f32 %v443, %v357
          %v460 = vadd.f32 %v444, %v360
          %v461 = vadd.f32 %v445, %v365
          %v462 = vadd.f32 %v446, %v368
          %v463 = vadd.f32 %v447, %v373
          %v464 = vadd.f32 %v448, %v376
          %v465 = vadd.f32 %v449, %v381
          %v466 = vadd.f32 %v450, %v384
          %v467 = vadd.f32 %v451, %v389
          %v468 = vadd.f32 %v452, %v392
          %v469 = vadd.f32 %v453, %v397
          %v470 = vadd.f32 %v454, %v400
          %v471 = vadd.f32 %v455, %v405
          %v472 = vadd.f32 %v456, %v408
          %v473 = vadd.f32 %v457, %v413
          %v474 = vadd.f32 %v458, %v416
          %475 = vst [vmem:[#allocation2] sm:$0xff] %v459
          %476 = vst [vmem:[#allocation2 + $0x8] sm:$0xff] %v460
          %477 = vst [vmem:[#allocation2 + $0x10] sm:$0xff] %v461
          %478 = vst [vmem:[#allocation2 + $0x18] sm:$0xff] %v462
          %479 = vst [vmem:[#allocation2 + $0x20] sm:$0xff] %v463
          %480 = vst [vmem:[#allocation2 + $0x28] sm:$0xff] %v464
          %481 = vst [vmem:[#allocation2 + $0x30] sm:$0xff] %v465
          %482 = vst [vmem:[#allocation2 + $0x38] sm:$0xff] %v466
          %483 = vst [vmem:[#allocation2 + $0x40] sm:$0xff] %v467
          %484 = vst [vmem:[#allocation2 + $0x48] sm:$0xff] %v468
          %485 = vst [vmem:[#allocation2 + $0x50] sm:$0xff] %v469
          %486 = vst [vmem:[#allocation2 + $0x58] sm:$0xff] %v470
          %487 = vst [vmem:[#allocation2 + $0x60] sm:$0xff] %v471
          %488 = vst [vmem:[#allocation2 + $0x68] sm:$0xff] %v472
          %489 = vst [vmem:[#allocation2 + $0x70] sm:$0xff] %v473
          %490 = vst [vmem:[#allocation2 + $0x78] sm:$0xff] %v474
        $region44: #{tpu_custom_call.1} parent=27 // pred_fallthru
          _
        %p491 = scmp.eq.s32.totalorder %s23, 2
        // Predicated region
        $region45: #{tpu_custom_call.1} parent=27 // pred_check
          %p492 = pneg %p491
        $region46: #{tpu_custom_call.1} parent=27 // pred_check_branch
          %494 = sbr.rel (%p492) target = $region48
        $region47: #{tpu_custom_call.1} parent=27 // pred_region
          %v495 = vld [vmem:[#allocation2] sm:$0xff]
          %v496 = vld [vmem:[#allocation2 + $0x8] sm:$0xff]
          %v497 = vld [vmem:[#allocation2 + $0x10] sm:$0xff]
          %v498 = vld [vmem:[#allocation2 + $0x18] sm:$0xff]
          %v499 = vld [vmem:[#allocation2 + $0x20] sm:$0xff]
          %v500 = vld [vmem:[#allocation2 + $0x28] sm:$0xff]
          %v501 = vld [vmem:[#allocation2 + $0x30] sm:$0xff]
          %v502 = vld [vmem:[#allocation2 + $0x38] sm:$0xff]
          %v503 = vld [vmem:[#allocation2 + $0x40] sm:$0xff]
          %v504 = vld [vmem:[#allocation2 + $0x48] sm:$0xff]
          %v505 = vld [vmem:[#allocation2 + $0x50] sm:$0xff]
          %v506 = vld [vmem:[#allocation2 + $0x58] sm:$0xff]
          %v507 = vld [vmem:[#allocation2 + $0x60] sm:$0xff]
          %v508 = vld [vmem:[#allocation2 + $0x68] sm:$0xff]
          %v509 = vld [vmem:[#allocation2 + $0x70] sm:$0xff]
          %v510 = vld [vmem:[#allocation2 + $0x78] sm:$0xff]
          %v511 = vmax.f32 %v495, 0.0
          %v512 = vmax.f32 %v496, 0.0
          %v513 = vmax.f32 %v497, 0.0
          %v514 = vmax.f32 %v498, 0.0
          %v515 = vmax.f32 %v499, 0.0
          %v516 = vmax.f32 %v500, 0.0
          %v517 = vmax.f32 %v501, 0.0
          %v518 = vmax.f32 %v502, 0.0
          %v519 = vmax.f32 %v503, 0.0
          %v520 = vmax.f32 %v504, 0.0
          %v521 = vmax.f32 %v505, 0.0
          %v522 = vmax.f32 %v506, 0.0
          %v523 = vmax.f32 %v507, 0.0
          %v524 = vmax.f32 %v508, 0.0
          %v525 = vmax.f32 %v509, 0.0
          %v526 = vmax.f32 %v510, 0.0
          %v527 = vpack.c.bf16 %v512, %v511
          %v528 = vpack.c.bf16 %v514, %v513
          %v529 = vpack.c.bf16 %v516, %v515
          %v530 = vpack.c.bf16 %v518, %v517
          %v531 = vpack.c.bf16 %v520, %v519
          %v532 = vpack.c.bf16 %v522, %v521
          %v533 = vpack.c.bf16 %v524, %v523
          %v534 = vpack.c.bf16 %v526, %v525
          %v543 = vunpack.c.l.b16 %v527
          %v544 = vunpack.c.h.b16 %v527
          %v545 = vunpack.c.l.b16 %v528
          %v546 = vunpack.c.h.b16 %v528
          %v547 = vunpack.c.l.b16 %v529
          %v548 = vunpack.c.h.b16 %v529
          %v549 = vunpack.c.l.b16 %v530
          %v550 = vunpack.c.h.b16 %v530
          %v551 = vunpack.c.l.b16 %v531
          %v552 = vunpack.c.h.b16 %v531
          %v553 = vunpack.c.l.b16 %v532
          %v554 = vunpack.c.h.b16 %v532
          %v555 = vunpack.c.l.b16 %v533
          %v556 = vunpack.c.h.b16 %v533
          %v557 = vunpack.c.l.b16 %v534
          %v558 = vunpack.c.h.b16 %v534
          %v559 = vpack.c.b16 %v543, %v543
          %v560 = vpack.c.b16 %v544, %v544
          %v561 = vpack.c.b16 %v545, %v545
          %v562 = vpack.c.b16 %v546, %v546
          %v563 = vpack.c.b16 %v547, %v547
          %v564 = vpack.c.b16 %v548, %v548
          %v565 = vpack.c.b16 %v549, %v549
          %v566 = vpack.c.b16 %v550, %v550
          %v567 = vpack.c.b16 %v551, %v551
          %v568 = vpack.c.b16 %v552, %v552
          %v569 = vpack.c.b16 %v553, %v553
          %v570 = vpack.c.b16 %v554, %v554
          %v571 = vpack.c.b16 %v555, %v555
          %v572 = vpack.c.b16 %v556, %v556
          %v573 = vpack.c.b16 %v557, %v557
          %v574 = vpack.c.b16 %v558, %v558
          %591 = vst [vmem:[#allocation8] sm:$0xf] %v559
          %592 = vst [vmem:[#allocation8 + $0x4] sm:$0xf] %v560
          %593 = vst [vmem:[#allocation8 + $0x8] sm:$0xf] %v561
          %594 = vst [vmem:[#allocation8 + $0xc] sm:$0xf] %v562
          %595 = vst [vmem:[#allocation8 + $0x10] sm:$0xf] %v563
          %596 = vst [vmem:[#allocation8 + $0x14] sm:$0xf] %v564
          %597 = vst [vmem:[#allocation8 + $0x18] sm:$0xf] %v565
          %598 = vst [vmem:[#allocation8 + $0x1c] sm:$0xf] %v566
          %599 = vst [vmem:[#allocation8 + $0x20] sm:$0xf] %v567
          %600 = vst [vmem:[#allocation8 + $0x24] sm:$0xf] %v568
          %601 = vst [vmem:[#allocation8 + $0x28] sm:$0xf] %v569
          %602 = vst [vmem:[#allocation8 + $0x2c] sm:$0xf] %v570
          %603 = vst [vmem:[#allocation8 + $0x30] sm:$0xf] %v571
          %604 = vst [vmem:[#allocation8 + $0x34] sm:$0xf] %v572
          %605 = vst [vmem:[#allocation8 + $0x38] sm:$0xf] %v573
          %606 = vst [vmem:[#allocation8 + $0x3c] sm:$0xf] %v574
        $region48: #{tpu_custom_call.1} parent=27 // pred_fallthru
          _
        // Predicated region
        $region49: #{tpu_custom_call.1} parent=27 // pred_check
          %p607 = pneg %p97
        $region50: #{tpu_custom_call.1} parent=27 // pred_check_branch
          %609 = sbr.rel (%p607) target = $region52
        $region51: #{tpu_custom_call.1} parent=27 // pred_region
          %s610 = smul.u32 16, %s22
          %s612 = ssub.s32 1024, 1024
          %613 = vsyncadd [#allocation5], %s612
          %s614 = smul.addr %s610, 64
          %s615 = scalar_lea.hbm %s2, %s614
          %s616 = sshll.u32 [#allocation8], 4
          %s617 = int_to_ptr.vmem [resolvable:$true] %s616
          %622 = dma.vmem_to_hbm [thread:$0]  %s617, 1024, %s615, [#allocation5], 64, 64, 4
        $region52: #{tpu_custom_call.1} parent=27 // pred_fallthru
          _
        // Predicated region
        $region53: #{tpu_custom_call.1} parent=27 // pred_check
          %p623 = pneg %p97
        $region54: #{tpu_custom_call.1} parent=27 // pred_check_branch
          %625 = sbr.rel (%p623) target = $region56
        $region55: #{tpu_custom_call.1} parent=27 // pred_region
          %626 = dma.done [#allocation5], 1024
        $region56: #{tpu_custom_call.1} parent=27 // pred_fallthru
          _
      $region28: #{tpu_custom_call.1} parent=5 // pred_fallthru
        _
      %p627 = scmp.le.s32.totalorder 2, %s13
      // Predicated region
      $region57: #{tpu_custom_call.1} parent=5 // pred_check
        %p628 = pneg %p627
      $region58: #{tpu_custom_call.1} parent=5 // pred_check_branch
        %630 = sbr.rel (%p628) target = $region60
      $region59: #{tpu_custom_call.1} parent=5 // pred_region
        %s631 = ssub.s32 %s13, 2
      $region60: #{tpu_custom_call.1} parent=5 // pred_fallthru
        _
    $region6: #{tpu_custom_call.1} parent=1 // loop_footer
      %s17 = sadd.s32 1, %s13
    $region7: #{tpu_custom_call.1} parent=1 // loop_footer_branch
      %12 = sbr.rel target = $region3
    $region8: #{tpu_custom_call.1} parent=1 // loop_exit
      _
    %632 = vsyncpa [#allocation4], 1
    %s633 = scalar_lea.sflag [#allocation4], 1
    %634 = vsyncpa %s633, 1
    %635 = vsyncpa [#allocation7], 1
    %636 = vsyncpa [#allocation5], 1
    %s637 = scalar_lea.sflag [#allocation5], 1
    %638 = vsyncpa %s637, 1

</llo_original>
